<compile_context>
chip_gen: v6e
topology: v6e:2x2x1
jax: 0.10.0
libtpu: 0.0.40
codegen_flags: <defaults>
</compile_context>

<pallas_src>
import functools

import jax
import jax.numpy as jnp
from jax.experimental import pallas as pl
from jax.experimental.pallas import tpu as pltpu


def _pos_embed_kernel(col_t_ref, row_t_ref, out_ref, *, h, w):
    """Whole (2F, H*W) positional-embedding slab in one invocation.

    col_t_ref: (F, 50)    col_embed.weight^T (features on sublanes)
    row_t_ref: (F, 50)    row_embed.weight^T (features on sublanes)
    out_ref:   (2F, H*W)  lane-dense flattened output:
        out[c,     h*W + w] = col_weight[w, c]
        out[F + c, h*W + w] = row_weight[h, c]
    """
    f = col_t_ref.shape[0]
    col_sub = col_t_ref[:, :w]                      # (F, W): static slice, loaded once
    # h is a Python int (<= 50): fully unrolled at trace time.  Pure copies -> exact,
    # and there is no broadcast+reshape relayout anywhere in the body.
    for hh in range(h):
        lo = hh * w
        # col half: identical (F, W) slab for every output row h.
        out_ref[0:f, lo:lo + w] = col_sub
        # row half: row_weight[hh, :] broadcast along the W lanes of this row.
        out_ref[f:2 * f, lo:lo + w] = jnp.broadcast_to(
            row_t_ref[:, hh:hh + 1], (f, w))


def _lane_pad(n):
    return ((n + 127) // 128) * 128


def position_embedding_learned(x, col_weight, row_weight):
    """x: (B, C, H, W) NCHW (only its shape is used).  Returns (B, 2F, H, W)."""
    B, _, H, W = x.shape
    n_emb, F = col_weight.shape
    assert row_weight.shape == (n_emb, F)
    # Same implicit limit as the PyTorch module (embedding tables have 50 rows);
    # this also guarantees the single full-extent block fits comfortably in VMEM.
    assert H <= n_emb and W <= n_emb, "spatial size exceeds embedding table rows"

    dtype = col_weight.dtype
    itemsize = jnp.dtype(dtype).itemsize

    # One-time transposes outside the hot path (each ~50*F elements).
    col_t = jnp.transpose(col_weight)               # (F, 50)
    row_t = jnp.transpose(row_weight)               # (F, 50)

    # Tight VMEM budget: output block + two table blocks (x2 buffering) + headroom.
    out_block_bytes = 2 * F * _lane_pad(H * W) * itemsize
    tab_block_bytes = F * _lane_pad(n_emb) * itemsize
    vmem_limit = int(2 * out_block_bytes + 4 * tab_block_bytes + (4 << 20))

    flat = pl.pallas_call(
        functools.partial(_pos_embed_kernel, h=H, w=W),
        out_shape=jax.ShapeDtypeStruct((2 * F, H * W), dtype),
        grid=(1,),
        in_specs=[
            pl.BlockSpec((F, n_emb), lambda i: (0, 0)),      # col table (transposed)
            pl.BlockSpec((F, n_emb), lambda i: (0, 0)),      # row table (transposed)
        ],
        out_specs=pl.BlockSpec((2 * F, H * W), lambda i: (0, 0)),
        compiler_params=pltpu.CompilerParams(
            dimension_semantics=("arbitrary",),
            vmem_limit_bytes=vmem_limit,
        ),
    )(col_t, row_t)

    # Row-major (2F, H*W) has the same memory layout as NCHW (2F, H, W): free reshape.
    pos = flat.reshape(1, 2 * F, H, W)
    # Batch broadcast stays outside the kernel (no redundant HBM writes in-kernel).
    return jnp.broadcast_to(pos, (B, 2 * F, H, W))


def _reference(x, col_weight, row_weight):
    # Pure-JAX reproduction of the PyTorch forward, for verification.
    B, _, H, W = x.shape
    x_emb = col_weight[:W]                                   # (W, F)
    y_emb = row_weight[:H]                                   # (H, F)
    pos = jnp.concatenate(
        [jnp.broadcast_to(x_emb[None, :, :], (H, W, x_emb.shape[-1])),
         jnp.broadcast_to(y_emb[:, None, :], (H, W, y_emb.shape[-1]))],
        axis=-1,
    )                                                        # (H, W, 2F)
    pos = jnp.transpose(pos, (2, 0, 1))[None]                # (1, 2F, H, W)
    return jnp.broadcast_to(pos, (B,) + pos.shape[1:])


if __name__ == "__main__":
    num_pos_feats = 32                 # module default is 256; small for the test
    B, C, H, W = 2, 4, 16, 16

    key = jax.random.PRNGKey(0)
    k_col, k_row, k_x = jax.random.split(key, 3)
    # nn.init.uniform_ -> U[0, 1)
    col_weight = jax.random.uniform(k_col, (50, num_pos_feats), dtype=jnp.float32)
    row_weight = jax.random.uniform(k_row, (50, num_pos_feats), dtype=jnp.float32)
    x = jax.random.normal(k_x, (B, C, H, W), dtype=jnp.float32)

    pos = jax.block_until_ready(position_embedding_learned(x, col_weight, row_weight))
    ref = _reference(x, col_weight, row_weight)
    assert pos.shape == (B, 2 * num_pos_feats, H, W), pos.shape
    assert jnp.allclose(pos, ref), "mismatch vs reference (16x16)"

    # Non-square, non-power-of-two spatial size exercises the offset (masked) stores.
    x2 = jax.random.normal(k_x, (B, C, 12, 10), dtype=jnp.float32)
    pos2 = jax.block_until_ready(position_embedding_learned(x2, col_weight, row_weight))
    assert jnp.allclose(pos2, _reference(x2, col_weight, row_weight)), "mismatch (12x10)"

    print("KERNEL_OK")
</pallas_src>

<mosaic_0001>
module attributes {stable_mosaic.version = 11 : i64} {
  func.func @_pos_embed_kernel(%arg0: i32, %arg1: memref<32x50xf32, #tpu.memory_space<vmem>>, %arg2: memref<32x50xf32, #tpu.memory_space<vmem>>, %arg3: memref<64x256xf32, #tpu.memory_space<vmem>>) attributes {dimension_semantics = [#tpu.dimension_semantics<arbitrary>], iteration_bounds = array<i64: 1>, scalar_prefetch = 0 : i64, scratch_operands = 0 : i64, tpu.core_type = #tpu.core_type<tc>, window_params = [{pipeline_mode = #tpu.pipeline_mode<synchronous>, transform_indices = @transform_0, window_bounds = array<i64: 32, 50>}, {pipeline_mode = #tpu.pipeline_mode<synchronous>, transform_indices = @transform_1, window_bounds = array<i64: 32, 50>}, {pipeline_mode = #tpu.pipeline_mode<synchronous>, transform_indices = @transform_2, window_bounds = array<i64: 64, 256>}]} {
    %c0 = arith.constant 0 : index
    %c0_0 = arith.constant 0 : index
    %0 = vector.load %arg1[%c0, %c0_0] : memref<32x50xf32, #tpu.memory_space<vmem>>, vector<32x16xf32>
    %c0_1 = arith.constant 0 : index
    %c0_2 = arith.constant 0 : index
    %1 = vector.load %arg3[%c0_1, %c0_2] : memref<64x256xf32, #tpu.memory_space<vmem>>, vector<32x16xf32>
    tpu.vector_store %arg3[%c0_1, %c0_2], %0 {strides = array<i32>} : memref<64x256xf32, #tpu.memory_space<vmem>>, vector<32x16xf32>,
    %c0_3 = arith.constant 0 : index
    %c0_4 = arith.constant 0 : index
    %2 = vector.load %arg2[%c0_3, %c0_4] : memref<32x50xf32, #tpu.memory_space<vmem>>, vector<32x1xf32>
    %3 = vector.shape_cast %2 : vector<32x1xf32> to vector<32x1xf32>
    %4 = vector.broadcast %3 : vector<32x1xf32> to vector<32x16xf32>
    %c32 = arith.constant 32 : index
    %c0_5 = arith.constant 0 : index
    %5 = vector.load %arg3[%c32, %c0_5] : memref<64x256xf32, #tpu.memory_space<vmem>>, vector<32x16xf32>
    tpu.vector_store %arg3[%c32, %c0_5], %4 {strides = array<i32>} : memref<64x256xf32, #tpu.memory_space<vmem>>, vector<32x16xf32>,
    %c0_6 = arith.constant 0 : index
    %c16 = arith.constant 16 : index
    %6 = vector.load %arg3[%c0_6, %c16] : memref<64x256xf32, #tpu.memory_space<vmem>>, vector<32x16xf32>
    tpu.vector_store %arg3[%c0_6, %c16], %0 {strides = array<i32>} : memref<64x256xf32, #tpu.memory_space<vmem>>, vector<32x16xf32>,
    %c0_7 = arith.constant 0 : index
    %c1 = arith.constant 1 : index
    %7 = vector.load %arg2[%c0_7, %c1] : memref<32x50xf32, #tpu.memory_space<vmem>>, vector<32x1xf32>
    %8 = vector.shape_cast %7 : vector<32x1xf32> to vector<32x1xf32>
    %9 = vector.broadcast %8 : vector<32x1xf32> to vector<32x16xf32>
    %c32_8 = arith.constant 32 : index
    %c16_9 = arith.constant 16 : index
    %10 = vector.load %arg3[%c32_8, %c16_9] : memref<64x256xf32, #tpu.memory_space<vmem>>, vector<32x16xf32>
    tpu.vector_store %arg3[%c32_8, %c16_9], %9 {strides = array<i32>} : memref<64x256xf32, #tpu.memory_space<vmem>>, vector<32x16xf32>,
    %c0_10 = arith.constant 0 : index
    %c32_11 = arith.constant 32 : index
    %11 = vector.load %arg3[%c0_10, %c32_11] : memref<64x256xf32, #tpu.memory_space<vmem>>, vector<32x16xf32>
    tpu.vector_store %arg3[%c0_10, %c32_11], %0 {strides = array<i32>} : memref<64x256xf32, #tpu.memory_space<vmem>>, vector<32x16xf32>,
    %c0_12 = arith.constant 0 : index
    %c2 = arith.constant 2 : index
    %12 = vector.load %arg2[%c0_12, %c2] : memref<32x50xf32, #tpu.memory_space<vmem>>, vector<32x1xf32>
    %13 = vector.shape_cast %12 : vector<32x1xf32> to vector<32x1xf32>
    %14 = vector.broadcast %13 : vector<32x1xf32> to vector<32x16xf32>
    %c32_13 = arith.constant 32 : index
    %c32_14 = arith.constant 32 : index
    %15 = vector.load %arg3[%c32_13, %c32_14] : memref<64x256xf32, #tpu.memory_space<vmem>>, vector<32x16xf32>
    tpu.vector_store %arg3[%c32_13, %c32_14], %14 {strides = array<i32>} : memref<64x256xf32, #tpu.memory_space<vmem>>, vector<32x16xf32>,
    %c0_15 = arith.constant 0 : index
    %c48 = arith.constant 48 : index
    %16 = vector.load %arg3[%c0_15, %c48] : memref<64x256xf32, #tpu.memory_space<vmem>>, vector<32x16xf32>
    tpu.vector_store %arg3[%c0_15, %c48], %0 {strides = array<i32>} : memref<64x256xf32, #tpu.memory_space<vmem>>, vector<32x16xf32>,
    %c0_16 = arith.constant 0 : index
    %c3 = arith.constant 3 : index
    %17 = vector.load %arg2[%c0_16, %c3] : memref<32x50xf32, #tpu.memory_space<vmem>>, vector<32x1xf32>
    %18 = vector.shape_cast %17 : vector<32x1xf32> to vector<32x1xf32>
    %19 = vector.broadcast %18 : vector<32x1xf32> to vector<32x16xf32>
    %c32_17 = arith.constant 32 : index
    %c48_18 = arith.constant 48 : index
    %20 = vector.load %arg3[%c32_17, %c48_18] : memref<64x256xf32, #tpu.memory_space<vmem>>, vector<32x16xf32>
    tpu.vector_store %arg3[%c32_17, %c48_18], %19 {strides = array<i32>} : memref<64x256xf32, #tpu.memory_space<vmem>>, vector<32x16xf32>,
    %c0_19 = arith.constant 0 : index
    %c64 = arith.constant 64 : index
    %21 = vector.load %arg3[%c0_19, %c64] : memref<64x256xf32, #tpu.memory_space<vmem>>, vector<32x16xf32>
    tpu.vector_store %arg3[%c0_19, %c64], %0 {strides = array<i32>} : memref<64x256xf32, #tpu.memory_space<vmem>>, vector<32x16xf32>,
    %c0_20 = arith.constant 0 : index
    %c4 = arith.constant 4 : index
    %22 = vector.load %arg2[%c0_20, %c4] : memref<32x50xf32, #tpu.memory_space<vmem>>, vector<32x1xf32>
    %23 = vector.shape_cast %22 : vector<32x1xf32> to vector<32x1xf32>
    %24 = vector.broadcast %23 : vector<32x1xf32> to vector<32x16xf32>
    %c32_21 = arith.constant 32 : index
    %c64_22 = arith.constant 64 : index
    %25 = vector.load %arg3[%c32_21, %c64_22] : memref<64x256xf32, #tpu.memory_space<vmem>>, vector<32x16xf32>
    tpu.vector_store %arg3[%c32_21, %c64_22], %24 {strides = array<i32>} : memref<64x256xf32, #tpu.memory_space<vmem>>, vector<32x16xf32>,
    %c0_23 = arith.constant 0 : index
    %c80 = arith.constant 80 : index
    %26 = vector.load %arg3[%c0_23, %c80] : memref<64x256xf32, #tpu.memory_space<vmem>>, vector<32x16xf32>
    tpu.vector_store %arg3[%c0_23, %c80], %0 {strides = array<i32>} : memref<64x256xf32, #tpu.memory_space<vmem>>, vector<32x16xf32>,
    %c0_24 = arith.constant 0 : index
    %c5 = arith.constant 5 : index
    %27 = vector.load %arg2[%c0_24, %c5] : memref<32x50xf32, #tpu.memory_space<vmem>>, vector<32x1xf32>
    %28 = vector.shape_cast %27 : vector<32x1xf32> to vector<32x1xf32>
    %29 = vector.broadcast %28 : vector<32x1xf32> to vector<32x16xf32>
    %c32_25 = arith.constant 32 : index
    %c80_26 = arith.constant 80 : index
    %30 = vector.load %arg3[%c32_25, %c80_26] : memref<64x256xf32, #tpu.memory_space<vmem>>, vector<32x16xf32>
    tpu.vector_store %arg3[%c32_25, %c80_26], %29 {strides = array<i32>} : memref<64x256xf32, #tpu.memory_space<vmem>>, vector<32x16xf32>,
    %c0_27 = arith.constant 0 : index
    %c96 = arith.constant 96 : index
    %31 = vector.load %arg3[%c0_27, %c96] : memref<64x256xf32, #tpu.memory_space<vmem>>, vector<32x16xf32>
    tpu.vector_store %arg3[%c0_27, %c96], %0 {strides = array<i32>} : memref<64x256xf32, #tpu.memory_space<vmem>>, vector<32x16xf32>,
    %c0_28 = arith.constant 0 : index
    %c6 = arith.constant 6 : index
    %32 = vector.load %arg2[%c0_28, %c6] : memref<32x50xf32, #tpu.memory_space<vmem>>, vector<32x1xf32>
    %33 = vector.shape_cast %32 : vector<32x1xf32> to vector<32x1xf32>
    %34 = vector.broadcast %33 : vector<32x1xf32> to vector<32x16xf32>
    %c32_29 = arith.constant 32 : index
    %c96_30 = arith.constant 96 : index
    %35 = vector.load %arg3[%c32_29, %c96_30] : memref<64x256xf32, #tpu.memory_space<vmem>>, vector<32x16xf32>
    tpu.vector_store %arg3[%c32_29, %c96_30], %34 {strides = array<i32>} : memref<64x256xf32, #tpu.memory_space<vmem>>, vector<32x16xf32>,
    %c0_31 = arith.constant 0 : index
    %c112 = arith.constant 112 : index
    %36 = vector.load %arg3[%c0_31, %c112] : memref<64x256xf32, #tpu.memory_space<vmem>>, vector<32x16xf32>
    tpu.vector_store %arg3[%c0_31, %c112], %0 {strides = array<i32>} : memref<64x256xf32, #tpu.memory_space<vmem>>, vector<32x16xf32>,
    %c0_32 = arith.constant 0 : index
    %c7 = arith.constant 7 : index
    %37 = vector.load %arg2[%c0_32, %c7] : memref<32x50xf32, #tpu.memory_space<vmem>>, vector<32x1xf32>
    %38 = vector.shape_cast %37 : vector<32x1xf32> to vector<32x1xf32>
    %39 = vector.broadcast %38 : vector<32x1xf32> to vector<32x16xf32>
    %c32_33 = arith.constant 32 : index
    %c112_34 = arith.constant 112 : index
    %40 = vector.load %arg3[%c32_33, %c112_34] : memref<64x256xf32, #tpu.memory_space<vmem>>, vector<32x16xf32>
    tpu.vector_store %arg3[%c32_33, %c112_34], %39 {strides = array<i32>} : memref<64x256xf32, #tpu.memory_space<vmem>>, vector<32x16xf32>,
    %c0_35 = arith.constant 0 : index
    %c128 = arith.constant 128 : index
    %41 = vector.load %arg3[%c0_35, %c128] : memref<64x256xf32, #tpu.memory_space<vmem>>, vector<32x16xf32>
    tpu.vector_store %arg3[%c0_35, %c128], %0 {strides = array<i32>} : memref<64x256xf32, #tpu.memory_space<vmem>>, vector<32x16xf32>,
    %c0_36 = arith.constant 0 : index
    %c8 = arith.constant 8 : index
    %42 = vector.load %arg2[%c0_36, %c8] : memref<32x50xf32, #tpu.memory_space<vmem>>, vector<32x1xf32>
    %43 = vector.shape_cast %42 : vector<32x1xf32> to vector<32x1xf32>
    %44 = vector.broadcast %43 : vector<32x1xf32> to vector<32x16xf32>
    %c32_37 = arith.constant 32 : index
    %c128_38 = arith.constant 128 : index
    %45 = vector.load %arg3[%c32_37, %c128_38] : memref<64x256xf32, #tpu.memory_space<vmem>>, vector<32x16xf32>
    tpu.vector_store %arg3[%c32_37, %c128_38], %44 {strides = array<i32>} : memref<64x256xf32, #tpu.memory_space<vmem>>, vector<32x16xf32>,
    %c0_39 = arith.constant 0 : index
    %c144 = arith.constant 144 : index
    %46 = vector.load %arg3[%c0_39, %c144] : memref<64x256xf32, #tpu.memory_space<vmem>>, vector<32x16xf32>
    tpu.vector_store %arg3[%c0_39, %c144], %0 {strides = array<i32>} : memref<64x256xf32, #tpu.memory_space<vmem>>, vector<32x16xf32>,
    %c0_40 = arith.constant 0 : index
    %c9 = arith.constant 9 : index
    %47 = vector.load %arg2[%c0_40, %c9] : memref<32x50xf32, #tpu.memory_space<vmem>>, vector<32x1xf32>
    %48 = vector.shape_cast %47 : vector<32x1xf32> to vector<32x1xf32>
    %49 = vector.broadcast %48 : vector<32x1xf32> to vector<32x16xf32>
    %c32_41 = arith.constant 32 : index
    %c144_42 = arith.constant 144 : index
    %50 = vector.load %arg3[%c32_41, %c144_42] : memref<64x256xf32, #tpu.memory_space<vmem>>, vector<32x16xf32>
    tpu.vector_store %arg3[%c32_41, %c144_42], %49 {strides = array<i32>} : memref<64x256xf32, #tpu.memory_space<vmem>>, vector<32x16xf32>,
    %c0_43 = arith.constant 0 : index
    %c160 = arith.constant 160 : index
    %51 = vector.load %arg3[%c0_43, %c160] : memref<64x256xf32, #tpu.memory_space<vmem>>, vector<32x16xf32>
    tpu.vector_store %arg3[%c0_43, %c160], %0 {strides = array<i32>} : memref<64x256xf32, #tpu.memory_space<vmem>>, vector<32x16xf32>,
    %c0_44 = arith.constant 0 : index
    %c10 = arith.constant 10 : index
    %52 = vector.load %arg2[%c0_44, %c10] : memref<32x50xf32, #tpu.memory_space<vmem>>, vector<32x1xf32>
    %53 = vector.shape_cast %52 : vector<32x1xf32> to vector<32x1xf32>
    %54 = vector.broadcast %53 : vector<32x1xf32> to vector<32x16xf32>
    %c32_45 = arith.constant 32 : index
    %c160_46 = arith.constant 160 : index
    %55 = vector.load %arg3[%c32_45, %c160_46] : memref<64x256xf32, #tpu.memory_space<vmem>>, vector<32x16xf32>
    tpu.vector_store %arg3[%c32_45, %c160_46], %54 {strides = array<i32>} : memref<64x256xf32, #tpu.memory_space<vmem>>, vector<32x16xf32>,
    %c0_47 = arith.constant 0 : index
    %c176 = arith.constant 176 : index
    %56 = vector.load %arg3[%c0_47, %c176] : memref<64x256xf32, #tpu.memory_space<vmem>>, vector<32x16xf32>
    tpu.vector_store %arg3[%c0_47, %c176], %0 {strides = array<i32>} : memref<64x256xf32, #tpu.memory_space<vmem>>, vector<32x16xf32>,
    %c0_48 = arith.constant 0 : index
    %c11 = arith.constant 11 : index
    %57 = vector.load %arg2[%c0_48, %c11] : memref<32x50xf32, #tpu.memory_space<vmem>>, vector<32x1xf32>
    %58 = vector.shape_cast %57 : vector<32x1xf32> to vector<32x1xf32>
    %59 = vector.broadcast %58 : vector<32x1xf32> to vector<32x16xf32>
    %c32_49 = arith.constant 32 : index
    %c176_50 = arith.constant 176 : index
    %60 = vector.load %arg3[%c32_49, %c176_50] : memref<64x256xf32, #tpu.memory_space<vmem>>, vector<32x16xf32>
    tpu.vector_store %arg3[%c32_49, %c176_50], %59 {strides = array<i32>} : memref<64x256xf32, #tpu.memory_space<vmem>>, vector<32x16xf32>,
    %c0_51 = arith.constant 0 : index
    %c192 = arith.constant 192 : index
    %61 = vector.load %arg3[%c0_51, %c192] : memref<64x256xf32, #tpu.memory_space<vmem>>, vector<32x16xf32>
    tpu.vector_store %arg3[%c0_51, %c192], %0 {strides = array<i32>} : memref<64x256xf32, #tpu.memory_space<vmem>>, vector<32x16xf32>,
    %c0_52 = arith.constant 0 : index
    %c12 = arith.constant 12 : index
    %62 = vector.load %arg2[%c0_52, %c12] : memref<32x50xf32, #tpu.memory_space<vmem>>, vector<32x1xf32>
    %63 = vector.shape_cast %62 : vector<32x1xf32> to vector<32x1xf32>
    %64 = vector.broadcast %63 : vector<32x1xf32> to vector<32x16xf32>
    %c32_53 = arith.constant 32 : index
    %c192_54 = arith.constant 192 : index
    %65 = vector.load %arg3[%c32_53, %c192_54] : memref<64x256xf32, #tpu.memory_space<vmem>>, vector<32x16xf32>
    tpu.vector_store %arg3[%c32_53, %c192_54], %64 {strides = array<i32>} : memref<64x256xf32, #tpu.memory_space<vmem>>, vector<32x16xf32>,
    %c0_55 = arith.constant 0 : index
    %c208 = arith.constant 208 : index
    %66 = vector.load %arg3[%c0_55, %c208] : memref<64x256xf32, #tpu.memory_space<vmem>>, vector<32x16xf32>
    tpu.vector_store %arg3[%c0_55, %c208], %0 {strides = array<i32>} : memref<64x256xf32, #tpu.memory_space<vmem>>, vector<32x16xf32>,
    %c0_56 = arith.constant 0 : index
    %c13 = arith.constant 13 : index
    %67 = vector.load %arg2[%c0_56, %c13] : memref<32x50xf32, #tpu.memory_space<vmem>>, vector<32x1xf32>
    %68 = vector.shape_cast %67 : vector<32x1xf32> to vector<32x1xf32>
    %69 = vector.broadcast %68 : vector<32x1xf32> to vector<32x16xf32>
    %c32_57 = arith.constant 32 : index
    %c208_58 = arith.constant 208 : index
    %70 = vector.load %arg3[%c32_57, %c208_58] : memref<64x256xf32, #tpu.memory_space<vmem>>, vector<32x16xf32>
    tpu.vector_store %arg3[%c32_57, %c208_58], %69 {strides = array<i32>} : memref<64x256xf32, #tpu.memory_space<vmem>>, vector<32x16xf32>,
    %c0_59 = arith.constant 0 : index
    %c224 = arith.constant 224 : index
    %71 = vector.load %arg3[%c0_59, %c224] : memref<64x256xf32, #tpu.memory_space<vmem>>, vector<32x16xf32>
    tpu.vector_store %arg3[%c0_59, %c224], %0 {strides = array<i32>} : memref<64x256xf32, #tpu.memory_space<vmem>>, vector<32x16xf32>,
    %c0_60 = arith.constant 0 : index
    %c14 = arith.constant 14 : index
    %72 = vector.load %arg2[%c0_60, %c14] : memref<32x50xf32, #tpu.memory_space<vmem>>, vector<32x1xf32>
    %73 = vector.shape_cast %72 : vector<32x1xf32> to vector<32x1xf32>
    %74 = vector.broadcast %73 : vector<32x1xf32> to vector<32x16xf32>
    %c32_61 = arith.constant 32 : index
    %c224_62 = arith.constant 224 : index
    %75 = vector.load %arg3[%c32_61, %c224_62] : memref<64x256xf32, #tpu.memory_space<vmem>>, vector<32x16xf32>
    tpu.vector_store %arg3[%c32_61, %c224_62], %74 {strides = array<i32>} : memref<64x256xf32, #tpu.memory_space<vmem>>, vector<32x16xf32>,
    %c0_63 = arith.constant 0 : index
    %c240 = arith.constant 240 : index
    %76 = vector.load %arg3[%c0_63, %c240] : memref<64x256xf32, #tpu.memory_space<vmem>>, vector<32x16xf32>
    tpu.vector_store %arg3[%c0_63, %c240], %0 {strides = array<i32>} : memref<64x256xf32, #tpu.memory_space<vmem>>, vector<32x16xf32>,
    %c0_64 = arith.constant 0 : index
    %c15 = arith.constant 15 : index
    %77 = vector.load %arg2[%c0_64, %c15] : memref<32x50xf32, #tpu.memory_space<vmem>>, vector<32x1xf32>
    %78 = vector.shape_cast %77 : vector<32x1xf32> to vector<32x1xf32>
    %79 = vector.broadcast %78 : vector<32x1xf32> to vector<32x16xf32>
    %c32_65 = arith.constant 32 : index
    %c240_66 = arith.constant 240 : index
    %80 = vector.load %arg3[%c32_65, %c240_66] : memref<64x256xf32, #tpu.memory_space<vmem>>, vector<32x16xf32>
    tpu.vector_store %arg3[%c32_65, %c240_66], %79 {strides = array<i32>} : memref<64x256xf32, #tpu.memory_space<vmem>>, vector<32x16xf32>,
    return
  }
  func.func @transform_0(%arg0: i32) -> (i32, i32) {
    %c0_i32 = arith.constant 0 : i32
    %c0_i32_0 = arith.constant 0 : i32
    %c0_i32_1 = arith.constant 0 : i32
    return %c0_i32, %c0_i32_0 : i32, i32
  }
  func.func @transform_1(%arg0: i32) -> (i32, i32) {
    %c0_i32 = arith.constant 0 : i32
    %c0_i32_0 = arith.constant 0 : i32
    %c0_i32_1 = arith.constant 0 : i32
    return %c0_i32, %c0_i32_0 : i32, i32
  }
  func.func @transform_2(%arg0: i32) -> (i32, i32) {
    %c0_i32 = arith.constant 0 : i32
    %c0_i32_0 = arith.constant 0 : i32
    %c0_i32_1 = arith.constant 0 : i32
    return %c0_i32, %c0_i32_0 : i32, i32
  }
}

</mosaic_0001>

<llo_original>
// kernel: tpu_custom_call.1
$region0: #{tpu_custom_call.1}
  #allocation0 [shape = 'u32[]', space=smem, size = 0x4, offset = 0x4, fixed_abs, tag = 'smem constant byte address 0x4 - core index']
  #allocation1 [shape = 'u32[144,128]{1,0:T(1,128)}', space=vmem, size = 0x12000, scoped, tag = 'internal scratch']
  %s0 = inlined_call_operand.hbm [shape: f32[32,50], index: 0, kind: input, shape index: {}]
  %s1 = inlined_call_operand.hbm [shape: f32[32,50], index: 1, kind: input, shape index: {}]
  %s2 = inlined_call_operand.hbm [shape: f32[64,256], index: 2, kind: output, shape index: {}]
  %s3 = sld [smem:[#allocation0]]
  $region26: #{tpu_custom_call.1} parent=0
    _
  %s5 = ssub.s32 1, %s3
  %s6 = scalar_select 0, %s5, %s3
  $region1: #{tpu_custom_call.1} parent=0
    #allocation2 [shape = 'u8[16384]{0}', space=vmem, size = 0x4000, scoped, tag = 'input window, operand 0, single buffered']
    #allocation3 [shape = 's32[1]{0}', space=sflag, size = 0x4, scoped, tag = 'scoped memory for tpu_custom_call.1']
    #allocation4 [shape = 's32[1]{0}', space=sflag, size = 0x4, scoped, tag = 'scoped memory for tpu_custom_call.1']
    #allocation5 [shape = 'u8[16384]{0}', space=vmem, size = 0x4000, scoped, tag = 'input window, operand 1, single buffered']
    #allocation6 [shape = 's32[1]{0}', space=sflag, size = 0x4, scoped, tag = 'scoped memory for tpu_custom_call.1']
    #allocation7 [shape = 'u8[65536]{0}', space=vmem, size = 0x10000, scoped, tag = 'output window, operand 0, single buffered']
    %7 = vsyncpa [#allocation3], 0
    %8 = vsyncpa [#allocation6], 0
    %9 = vsyncpa [#allocation4], 0
    // Predicated region
    $region2: #{tpu_custom_call.1} parent=1 // pred_check
      _
    $region3: #{tpu_custom_call.1} parent=1 // pred_check_branch
      %11 = sbr.rel (0) target = $region5
    $region4: #{tpu_custom_call.1} parent=1 // pred_region
      %s13 = ssub.s32 512, 512
      %14 = vsyncadd [#allocation3], %s13
      %s15 = sshll.u32 [#allocation2], 4
      %s16 = int_to_ptr.vmem [resolvable:$true] %s15
      %21 = dma.hbm_to_vmem [thread:$0]  %s0, 512, %s16, [#allocation3], 128, 128, 8
    $region5: #{tpu_custom_call.1} parent=1 // pred_fallthru
      _
    // Predicated region
    $region6: #{tpu_custom_call.1} parent=1 // pred_check
      _
    $region7: #{tpu_custom_call.1} parent=1 // pred_check_branch
      %23 = sbr.rel (0) target = $region9
    $region8: #{tpu_custom_call.1} parent=1 // pred_region
      %s25 = ssub.s32 512, 512
      %26 = vsyncadd [#allocation6], %s25
      %s27 = sshll.u32 [#allocation5], 4
      %s28 = int_to_ptr.vmem [resolvable:$true] %s27
      %33 = dma.hbm_to_vmem [thread:$0]  %s1, 512, %s28, [#allocation6], 128, 128, 8
    $region9: #{tpu_custom_call.1} parent=1 // pred_fallthru
      _
    // Predicated region
    $region10: #{tpu_custom_call.1} parent=1 // pred_check
      _
    $region11: #{tpu_custom_call.1} parent=1 // pred_check_branch
      %35 = sbr.rel (0) target = $region13
    $region12: #{tpu_custom_call.1} parent=1 // pred_region
      %36 = dma.done [#allocation3], 512
    $region13: #{tpu_custom_call.1} parent=1 // pred_fallthru
      _
    // Predicated region
    $region14: #{tpu_custom_call.1} parent=1 // pred_check
      _
    $region15: #{tpu_custom_call.1} parent=1 // pred_check_branch
      %38 = sbr.rel (0) target = $region17
    $region16: #{tpu_custom_call.1} parent=1 // pred_region
      %39 = dma.done [#allocation6], 512
    $region17: #{tpu_custom_call.1} parent=1 // pred_fallthru
      _
    %v40 = vld [vmem:[#allocation2] sm:$0xff]
    %v41 = vld [vmem:[#allocation2 + $0x8] sm:$0xff]
    %v42 = vld [vmem:[#allocation2 + $0x10] sm:$0xff]
    %v43 = vld [vmem:[#allocation2 + $0x18] sm:$0xff]
    %vm44 = vcmask 130048
    %45 = vst.msk [vmem:[#allocation7] sm:$0xff] %vm44, %v40
    %46 = vst.msk [vmem:[#allocation7 + $0x10] sm:$0xff] %vm44, %v41
    %47 = vst.msk [vmem:[#allocation7 + $0x20] sm:$0xff] %vm44, %v42
    %48 = vst.msk [vmem:[#allocation7 + $0x30] sm:$0xff] %vm44, %v43
    %v49 = vld [vmem:[#allocation5] sm:$0xff]
    %v50 = vld [vmem:[#allocation5 + $0x8] sm:$0xff]
    %v51 = vld [vmem:[#allocation5 + $0x10] sm:$0xff]
    %v52 = vld [vmem:[#allocation5 + $0x18] sm:$0xff]
    %54 = vset.pattern.permute.xlu0 0
    %55 = vperm.xlu0 %54, %v49
    %v56 = vpop.permute.xlu0 %55
    %59 = vset.pattern.permute.xlu0 0
    %60 = vperm.xlu0 %59, %v50
    %v61 = vpop.permute.xlu0 %60
    %64 = vset.pattern.permute.xlu0 0
    %65 = vperm.xlu0 %64, %v51
    %v66 = vpop.permute.xlu0 %65
    %69 = vset.pattern.permute.xlu0 0
    %70 = vperm.xlu0 %69, %v52
    %v71 = vpop.permute.xlu0 %70
    %73 = vst.msk [vmem:[#allocation7 + $0x40] sm:$0xff] %vm44, %v56
    %74 = vst.msk [vmem:[#allocation7 + $0x50] sm:$0xff] %vm44, %v61
    %75 = vst.msk [vmem:[#allocation7 + $0x60] sm:$0xff] %vm44, %v66
    %76 = vst.msk [vmem:[#allocation7 + $0x70] sm:$0xff] %vm44, %v71
    %81 = vrot.lane.b32.xlu0 %v40, 16
    %v82 = vpop.permute.xlu0 %81
    %83 = vrot.lane.b32.xlu0 %v41, 16
    %v84 = vpop.permute.xlu0 %83
    %85 = vrot.lane.b32.xlu0 %v42, 16
    %v86 = vpop.permute.xlu0 %85
    %87 = vrot.lane.b32.xlu0 %v43, 16
    %v88 = vpop.permute.xlu0 %87
    %vm93 = vcmask 261248
    %94 = vst.msk [vmem:[#allocation7] sm:$0xff] %vm93, %v82
    %95 = vst.msk [vmem:[#allocation7 + $0x10] sm:$0xff] %vm93, %v84
    %96 = vst.msk [vmem:[#allocation7 + $0x20] sm:$0xff] %vm93, %v86
    %97 = vst.msk [vmem:[#allocation7 + $0x30] sm:$0xff] %vm93, %v88
    %v98 = vld [vmem:[#allocation5] sm:$0xff]
    %v99 = vld [vmem:[#allocation5 + $0x8] sm:$0xff]
    %v100 = vld [vmem:[#allocation5 + $0x10] sm:$0xff]
    %v101 = vld [vmem:[#allocation5 + $0x18] sm:$0xff]
    %103 = vset.pattern.permute.xlu0 1
    %104 = vperm.xlu0 %103, %v98
    %v105 = vpop.permute.xlu0 %104
    %108 = vset.pattern.permute.xlu0 1
    %109 = vperm.xlu0 %108, %v99
    %v110 = vpop.permute.xlu0 %109
    %113 = vset.pattern.permute.xlu0 1
    %114 = vperm.xlu0 %113, %v100
    %v115 = vpop.permute.xlu0 %114
    %118 = vset.pattern.permute.xlu0 1
    %119 = vperm.xlu0 %118, %v101
    %v120 = vpop.permute.xlu0 %119
    %122 = vst.msk [vmem:[#allocation7 + $0x40] sm:$0xff] %vm93, %v105
    %123 = vst.msk [vmem:[#allocation7 + $0x50] sm:$0xff] %vm93, %v110
    %124 = vst.msk [vmem:[#allocation7 + $0x60] sm:$0xff] %vm93, %v115
    %125 = vst.msk [vmem:[#allocation7 + $0x70] sm:$0xff] %vm93, %v120
    %126 = vrot.lane.b32.xlu0 %v40, 32
    %v127 = vpop.permute.xlu0 %126
    %128 = vrot.lane.b32.xlu0 %v41, 32
    %v129 = vpop.permute.xlu0 %128
    %130 = vrot.lane.b32.xlu0 %v42, 32
    %v131 = vpop.permute.xlu0 %130
    %132 = vrot.lane.b32.xlu0 %v43, 32
    %v133 = vpop.permute.xlu0 %132
    %vm138 = vcmask 392448
    %139 = vst.msk [vmem:[#allocation7] sm:$0xff] %vm138, %v127
    %140 = vst.msk [vmem:[#allocation7 + $0x10] sm:$0xff] %vm138, %v129
    %141 = vst.msk [vmem:[#allocation7 + $0x20] sm:$0xff] %vm138, %v131
    %142 = vst.msk [vmem:[#allocation7 + $0x30] sm:$0xff] %vm138, %v133
    %v143 = vld [vmem:[#allocation5] sm:$0xff]
    %v144 = vld [vmem:[#allocation5 + $0x8] sm:$0xff]
    %v145 = vld [vmem:[#allocation5 + $0x10] sm:$0xff]
    %v146 = vld [vmem:[#allocation5 + $0x18] sm:$0xff]
    %148 = vset.pattern.permute.xlu0 2
    %149 = vperm.xlu0 %148, %v143
    %v150 = vpop.permute.xlu0 %149
    %153 = vset.pattern.permute.xlu0 2
    %154 = vperm.xlu0 %153, %v144
    %v155 = vpop.permute.xlu0 %154
    %158 = vset.pattern.permute.xlu0 2
    %159 = vperm.xlu0 %158, %v145
    %v160 = vpop.permute.xlu0 %159
    %163 = vset.pattern.permute.xlu0 2
    %164 = vperm.xlu0 %163, %v146
    %v165 = vpop.permute.xlu0 %164
    %167 = vst.msk [vmem:[#allocation7 + $0x40] sm:$0xff] %vm138, %v150
    %168 = vst.msk [vmem:[#allocation7 + $0x50] sm:$0xff] %vm138, %v155
    %169 = vst.msk [vmem:[#allocation7 + $0x60] sm:$0xff] %vm138, %v160
    %170 = vst.msk [vmem:[#allocation7 + $0x70] sm:$0xff] %vm138, %v165
    %171 = vrot.lane.b32.xlu0 %v40, 48
    %v172 = vpop.permute.xlu0 %171
    %173 = vrot.lane.b32.xlu0 %v41, 48
    %v174 = vpop.permute.xlu0 %173
    %175 = vrot.lane.b32.xlu0 %v42, 48
    %v176 = vpop.permute.xlu0 %175
    %177 = vrot.lane.b32.xlu0 %v43, 48
    %v178 = vpop.permute.xlu0 %177
    %vm183 = vcmask 523648
    %184 = vst.msk [vmem:[#allocation7] sm:$0xff] %vm183, %v172
    %185 = vst.msk [vmem:[#allocation7 + $0x10] sm:$0xff] %vm183, %v174
    %186 = vst.msk [vmem:[#allocation7 + $0x20] sm:$0xff] %vm183, %v176
    %187 = vst.msk [vmem:[#allocation7 + $0x30] sm:$0xff] %vm183, %v178
    %v188 = vld [vmem:[#allocation5] sm:$0xff]
    %v189 = vld [vmem:[#allocation5 + $0x8] sm:$0xff]
    %v190 = vld [vmem:[#allocation5 + $0x10] sm:$0xff]
    %v191 = vld [vmem:[#allocation5 + $0x18] sm:$0xff]
    %193 = vset.pattern.permute.xlu0 3
    %194 = vperm.xlu0 %193, %v188
    %v195 = vpop.permute.xlu0 %194
    %198 = vset.pattern.permute.xlu0 3
    %199 = vperm.xlu0 %198, %v189
    %v200 = vpop.permute.xlu0 %199
    %203 = vset.pattern.permute.xlu0 3
    %204 = vperm.xlu0 %203, %v190
    %v205 = vpop.permute.xlu0 %204
    %208 = vset.pattern.permute.xlu0 3
    %209 = vperm.xlu0 %208, %v191
    %v210 = vpop.permute.xlu0 %209
    %212 = vst.msk [vmem:[#allocation7 + $0x40] sm:$0xff] %vm183, %v195
    %213 = vst.msk [vmem:[#allocation7 + $0x50] sm:$0xff] %vm183, %v200
    %214 = vst.msk [vmem:[#allocation7 + $0x60] sm:$0xff] %vm183, %v205
    %215 = vst.msk [vmem:[#allocation7 + $0x70] sm:$0xff] %vm183, %v210
    %216 = vrot.lane.b32.xlu0 %v40, 64
    %v217 = vpop.permute.xlu0 %216
    %218 = vrot.lane.b32.xlu0 %v41, 64
    %v219 = vpop.permute.xlu0 %218
    %220 = vrot.lane.b32.xlu0 %v42, 64
    %v221 = vpop.permute.xlu0 %220
    %222 = vrot.lane.b32.xlu0 %v43, 64
    %v223 = vpop.permute.xlu0 %222
    %vm228 = vcmask 654848
    %229 = vst.msk [vmem:[#allocation7] sm:$0xff] %vm228, %v217
    %230 = vst.msk [vmem:[#allocation7 + $0x10] sm:$0xff] %vm228, %v219
    %231 = vst.msk [vmem:[#allocation7 + $0x20] sm:$0xff] %vm228, %v221
    %232 = vst.msk [vmem:[#allocation7 + $0x30] sm:$0xff] %vm228, %v223
    %v233 = vld [vmem:[#allocation5] sm:$0xff]
    %v234 = vld [vmem:[#allocation5 + $0x8] sm:$0xff]
    %v235 = vld [vmem:[#allocation5 + $0x10] sm:$0xff]
    %v236 = vld [vmem:[#allocation5 + $0x18] sm:$0xff]
    %238 = vset.pattern.permute.xlu0 4
    %239 = vperm.xlu0 %238, %v233
    %v240 = vpop.permute.xlu0 %239
    %243 = vset.pattern.permute.xlu0 4
    %244 = vperm.xlu0 %243, %v234
    %v245 = vpop.permute.xlu0 %244
    %248 = vset.pattern.permute.xlu0 4
    %249 = vperm.xlu0 %248, %v235
    %v250 = vpop.permute.xlu0 %249
    %253 = vset.pattern.permute.xlu0 4
    %254 = vperm.xlu0 %253, %v236
    %v255 = vpop.permute.xlu0 %254
    %257 = vst.msk [vmem:[#allocation7 + $0x40] sm:$0xff] %vm228, %v240
    %258 = vst.msk [vmem:[#allocation7 + $0x50] sm:$0xff] %vm228, %v245
    %259 = vst.msk [vmem:[#allocation7 + $0x60] sm:$0xff] %vm228, %v250
    %260 = vst.msk [vmem:[#allocation7 + $0x70] sm:$0xff] %vm228, %v255
    %261 = vrot.lane.b32.xlu0 %v40, 80
    %v262 = vpop.permute.xlu0 %261
    %263 = vrot.lane.b32.xlu0 %v41, 80
    %v264 = vpop.permute.xlu0 %263
    %265 = vrot.lane.b32.xlu0 %v42, 80
    %v266 = vpop.permute.xlu0 %265
    %267 = vrot.lane.b32.xlu0 %v43, 80
    %v268 = vpop.permute.xlu0 %267
    %vm273 = vcmask 786048
    %274 = vst.msk [vmem:[#allocation7] sm:$0xff] %vm273, %v262
    %275 = vst.msk [vmem:[#allocation7 + $0x10] sm:$0xff] %vm273, %v264
    %276 = vst.msk [vmem:[#allocation7 + $0x20] sm:$0xff] %vm273, %v266
    %277 = vst.msk [vmem:[#allocation7 + $0x30] sm:$0xff] %vm273, %v268
    %v278 = vld [vmem:[#allocation5] sm:$0xff]
    %v279 = vld [vmem:[#allocation5 + $0x8] sm:$0xff]
    %v280 = vld [vmem:[#allocation5 + $0x10] sm:$0xff]
    %v281 = vld [vmem:[#allocation5 + $0x18] sm:$0xff]
    %283 = vset.pattern.permute.xlu0 5
    %284 = vperm.xlu0 %283, %v278
    %v285 = vpop.permute.xlu0 %284
    %288 = vset.pattern.permute.xlu0 5
    %289 = vperm.xlu0 %288, %v279
    %v290 = vpop.permute.xlu0 %289
    %293 = vset.pattern.permute.xlu0 5
    %294 = vperm.xlu0 %293, %v280
    %v295 = vpop.permute.xlu0 %294
    %298 = vset.pattern.permute.xlu0 5
    %299 = vperm.xlu0 %298, %v281
    %v300 = vpop.permute.xlu0 %299
    %302 = vst.msk [vmem:[#allocation7 + $0x40] sm:$0xff] %vm273, %v285
    %303 = vst.msk [vmem:[#allocation7 + $0x50] sm:$0xff] %vm273, %v290
    %304 = vst.msk [vmem:[#allocation7 + $0x60] sm:$0xff] %vm273, %v295
    %305 = vst.msk [vmem:[#allocation7 + $0x70] sm:$0xff] %vm273, %v300
    %306 = vrot.lane.b32.xlu0 %v40, 96
    %v307 = vpop.permute.xlu0 %306
    %308 = vrot.lane.b32.xlu0 %v41, 96
    %v309 = vpop.permute.xlu0 %308
    %310 = vrot.lane.b32.xlu0 %v42, 96
    %v311 = vpop.permute.xlu0 %310
    %312 = vrot.lane.b32.xlu0 %v43, 96
    %v313 = vpop.permute.xlu0 %312
    %vm318 = vcmask 917248
    %319 = vst.msk [vmem:[#allocation7] sm:$0xff] %vm318, %v307
    %320 = vst.msk [vmem:[#allocation7 + $0x10] sm:$0xff] %vm318, %v309
    %321 = vst.msk [vmem:[#allocation7 + $0x20] sm:$0xff] %vm318, %v311
    %322 = vst.msk [vmem:[#allocation7 + $0x30] sm:$0xff] %vm318, %v313
    %v323 = vld [vmem:[#allocation5] sm:$0xff]
    %v324 = vld [vmem:[#allocation5 + $0x8] sm:$0xff]
    %v325 = vld [vmem:[#allocation5 + $0x10] sm:$0xff]
    %v326 = vld [vmem:[#allocation5 + $0x18] sm:$0xff]
    %328 = vset.pattern.permute.xlu0 6
    %329 = vperm.xlu0 %328, %v323
    %v330 = vpop.permute.xlu0 %329
    %333 = vset.pattern.permute.xlu0 6
    %334 = vperm.xlu0 %333, %v324
    %v335 = vpop.permute.xlu0 %334
    %338 = vset.pattern.permute.xlu0 6
    %339 = vperm.xlu0 %338, %v325
    %v340 = vpop.permute.xlu0 %339
    %343 = vset.pattern.permute.xlu0 6
    %344 = vperm.xlu0 %343, %v326
    %v345 = vpop.permute.xlu0 %344
    %347 = vst.msk [vmem:[#allocation7 + $0x40] sm:$0xff] %vm318, %v330
    %348 = vst.msk [vmem:[#allocation7 + $0x50] sm:$0xff] %vm318, %v335
    %349 = vst.msk [vmem:[#allocation7 + $0x60] sm:$0xff] %vm318, %v340
    %350 = vst.msk [vmem:[#allocation7 + $0x70] sm:$0xff] %vm318, %v345
    %351 = vrot.lane.b32.xlu0 %v40, 112
    %v352 = vpop.permute.xlu0 %351
    %353 = vrot.lane.b32.xlu0 %v41, 112
    %v354 = vpop.permute.xlu0 %353
    %355 = vrot.lane.b32.xlu0 %v42, 112
    %v356 = vpop.permute.xlu0 %355
    %357 = vrot.lane.b32.xlu0 %v43, 112
    %v358 = vpop.permute.xlu0 %357
    %vm363 = vcmask 1048448
    %364 = vst.msk [vmem:[#allocation7] sm:$0xff] %vm363, %v352
    %365 = vst.msk [vmem:[#allocation7 + $0x10] sm:$0xff] %vm363, %v354
    %366 = vst.msk [vmem:[#allocation7 + $0x20] sm:$0xff] %vm363, %v356
    %367 = vst.msk [vmem:[#allocation7 + $0x30] sm:$0xff] %vm363, %v358
    %v368 = vld [vmem:[#allocation5] sm:$0xff]
    %v369 = vld [vmem:[#allocation5 + $0x8] sm:$0xff]
    %v370 = vld [vmem:[#allocation5 + $0x10] sm:$0xff]
    %v371 = vld [vmem:[#allocation5 + $0x18] sm:$0xff]
    %373 = vset.pattern.permute.xlu0 7
    %374 = vperm.xlu0 %373, %v368
    %v375 = vpop.permute.xlu0 %374
    %378 = vset.pattern.permute.xlu0 7
    %379 = vperm.xlu0 %378, %v369
    %v380 = vpop.permute.xlu0 %379
    %383 = vset.pattern.permute.xlu0 7
    %384 = vperm.xlu0 %383, %v370
    %v385 = vpop.permute.xlu0 %384
    %388 = vset.pattern.permute.xlu0 7
    %389 = vperm.xlu0 %388, %v371
    %v390 = vpop.permute.xlu0 %389
    %392 = vst.msk [vmem:[#allocation7 + $0x40] sm:$0xff] %vm363, %v375
    %393 = vst.msk [vmem:[#allocation7 + $0x50] sm:$0xff] %vm363, %v380
    %394 = vst.msk [vmem:[#allocation7 + $0x60] sm:$0xff] %vm363, %v385
    %395 = vst.msk [vmem:[#allocation7 + $0x70] sm:$0xff] %vm363, %v390
    %396 = vst.msk [vmem:[#allocation7 + $0x8] sm:$0xff] %vm44, %v40
    %397 = vst.msk [vmem:[#allocation7 + $0x18] sm:$0xff] %vm44, %v41
    %398 = vst.msk [vmem:[#allocation7 + $0x28] sm:$0xff] %vm44, %v42
    %399 = vst.msk [vmem:[#allocation7 + $0x38] sm:$0xff] %vm44, %v43
    %v400 = vld [vmem:[#allocation5] sm:$0xff]
    %v401 = vld [vmem:[#allocation5 + $0x8] sm:$0xff]
    %v402 = vld [vmem:[#allocation5 + $0x10] sm:$0xff]
    %v403 = vld [vmem:[#allocation5 + $0x18] sm:$0xff]
    %405 = vset.pattern.permute.xlu0 8
    %406 = vperm.xlu0 %405, %v400
    %v407 = vpop.permute.xlu0 %406
    %410 = vset.pattern.permute.xlu0 8
    %411 = vperm.xlu0 %410, %v401
    %v412 = vpop.permute.xlu0 %411
    %415 = vset.pattern.permute.xlu0 8
    %416 = vperm.xlu0 %415, %v402
    %v417 = vpop.permute.xlu0 %416
    %420 = vset.pattern.permute.xlu0 8
    %421 = vperm.xlu0 %420, %v403
    %v422 = vpop.permute.xlu0 %421
    %424 = vst.msk [vmem:[#allocation7 + $0x48] sm:$0xff] %vm44, %v407
    %425 = vst.msk [vmem:[#allocation7 + $0x58] sm:$0xff] %vm44, %v412
    %426 = vst.msk [vmem:[#allocation7 + $0x68] sm:$0xff] %vm44, %v417
    %427 = vst.msk [vmem:[#allocation7 + $0x78] sm:$0xff] %vm44, %v422
    %428 = vst.msk [vmem:[#allocation7 + $0x8] sm:$0xff] %vm93, %v82
    %429 = vst.msk [vmem:[#allocation7 + $0x18] sm:$0xff] %vm93, %v84
    %430 = vst.msk [vmem:[#allocation7 + $0x28] sm:$0xff] %vm93, %v86
    %431 = vst.msk [vmem:[#allocation7 + $0x38] sm:$0xff] %vm93, %v88
    %v432 = vld [vmem:[#allocation5] sm:$0xff]
    %v433 = vld [vmem:[#allocation5 + $0x8] sm:$0xff]
    %v434 = vld [vmem:[#allocation5 + $0x10] sm:$0xff]
    %v435 = vld [vmem:[#allocation5 + $0x18] sm:$0xff]
    %437 = vset.pattern.permute.xlu0 9
    %438 = vperm.xlu0 %437, %v432
    %v439 = vpop.permute.xlu0 %438
    %442 = vset.pattern.permute.xlu0 9
    %443 = vperm.xlu0 %442, %v433
    %v444 = vpop.permute.xlu0 %443
    %447 = vset.pattern.permute.xlu0 9
    %448 = vperm.xlu0 %447, %v434
    %v449 = vpop.permute.xlu0 %448
    %452 = vset.pattern.permute.xlu0 9
    %453 = vperm.xlu0 %452, %v435
    %v454 = vpop.permute.xlu0 %453
    %456 = vst.msk [vmem:[#allocation7 + $0x48] sm:$0xff] %vm93, %v439
    %457 = vst.msk [vmem:[#allocation7 + $0x58] sm:$0xff] %vm93, %v444
    %458 = vst.msk [vmem:[#allocation7 + $0x68] sm:$0xff] %vm93, %v449
    %459 = vst.msk [vmem:[#allocation7 + $0x78] sm:$0xff] %vm93, %v454
    %460 = vst.msk [vmem:[#allocation7 + $0x8] sm:$0xff] %vm138, %v127
    %461 = vst.msk [vmem:[#allocation7 + $0x18] sm:$0xff] %vm138, %v129
    %462 = vst.msk [vmem:[#allocation7 + $0x28] sm:$0xff] %vm138, %v131
    %463 = vst.msk [vmem:[#allocation7 + $0x38] sm:$0xff] %vm138, %v133
    %v464 = vld [vmem:[#allocation5] sm:$0xff]
    %v465 = vld [vmem:[#allocation5 + $0x8] sm:$0xff]
    %v466 = vld [vmem:[#allocation5 + $0x10] sm:$0xff]
    %v467 = vld [vmem:[#allocation5 + $0x18] sm:$0xff]
    %469 = vset.pattern.permute.xlu0 10
    %470 = vperm.xlu0 %469, %v464
    %v471 = vpop.permute.xlu0 %470
    %474 = vset.pattern.permute.xlu0 10
    %475 = vperm.xlu0 %474, %v465
    %v476 = vpop.permute.xlu0 %475
    %479 = vset.pattern.permute.xlu0 10
    %480 = vperm.xlu0 %479, %v466
    %v481 = vpop.permute.xlu0 %480
    %484 = vset.pattern.permute.xlu0 10
    %485 = vperm.xlu0 %484, %v467
    %v486 = vpop.permute.xlu0 %485
    %488 = vst.msk [vmem:[#allocation7 + $0x48] sm:$0xff] %vm138, %v471
    %489 = vst.msk [vmem:[#allocation7 + $0x58] sm:$0xff] %vm138, %v476
    %490 = vst.msk [vmem:[#allocation7 + $0x68] sm:$0xff] %vm138, %v481
    %491 = vst.msk [vmem:[#allocation7 + $0x78] sm:$0xff] %vm138, %v486
    %492 = vst.msk [vmem:[#allocation7 + $0x8] sm:$0xff] %vm183, %v172
    %493 = vst.msk [vmem:[#allocation7 + $0x18] sm:$0xff] %vm183, %v174
    %494 = vst.msk [vmem:[#allocation7 + $0x28] sm:$0xff] %vm183, %v176
    %495 = vst.msk [vmem:[#allocation7 + $0x38] sm:$0xff] %vm183, %v178
    %v496 = vld [vmem:[#allocation5] sm:$0xff]
    %v497 = vld [vmem:[#allocation5 + $0x8] sm:$0xff]
    %v498 = vld [vmem:[#allocation5 + $0x10] sm:$0xff]
    %v499 = vld [vmem:[#allocation5 + $0x18] sm:$0xff]
    %501 = vset.pattern.permute.xlu0 11
    %502 = vperm.xlu0 %501, %v496
    %v503 = vpop.permute.xlu0 %502
    %506 = vset.pattern.permute.xlu0 11
    %507 = vperm.xlu0 %506, %v497
    %v508 = vpop.permute.xlu0 %507
    %511 = vset.pattern.permute.xlu0 11
    %512 = vperm.xlu0 %511, %v498
    %v513 = vpop.permute.xlu0 %512
    %516 = vset.pattern.permute.xlu0 11
    %517 = vperm.xlu0 %516, %v499
    %v518 = vpop.permute.xlu0 %517
    %520 = vst.msk [vmem:[#allocation7 + $0x48] sm:$0xff] %vm183, %v503
    %521 = vst.msk [vmem:[#allocation7 + $0x58] sm:$0xff] %vm183, %v508
    %522 = vst.msk [vmem:[#allocation7 + $0x68] sm:$0xff] %vm183, %v513
    %523 = vst.msk [vmem:[#allocation7 + $0x78] sm:$0xff] %vm183, %v518
    %524 = vst.msk [vmem:[#allocation7 + $0x8] sm:$0xff] %vm228, %v217
    %525 = vst.msk [vmem:[#allocation7 + $0x18] sm:$0xff] %vm228, %v219
    %526 = vst.msk [vmem:[#allocation7 + $0x28] sm:$0xff] %vm228, %v221
    %527 = vst.msk [vmem:[#allocation7 + $0x38] sm:$0xff] %vm228, %v223
    %v528 = vld [vmem:[#allocation5] sm:$0xff]
    %v529 = vld [vmem:[#allocation5 + $0x8] sm:$0xff]
    %v530 = vld [vmem:[#allocation5 + $0x10] sm:$0xff]
    %v531 = vld [vmem:[#allocation5 + $0x18] sm:$0xff]
    %533 = vset.pattern.permute.xlu0 12
    %534 = vperm.xlu0 %533, %v528
    %v535 = vpop.permute.xlu0 %534
    %538 = vset.pattern.permute.xlu0 12
    %539 = vperm.xlu0 %538, %v529
    %v540 = vpop.permute.xlu0 %539
    %543 = vset.pattern.permute.xlu0 12
    %544 = vperm.xlu0 %543, %v530
    %v545 = vpop.permute.xlu0 %544
    %548 = vset.pattern.permute.xlu0 12
    %549 = vperm.xlu0 %548, %v531
    %v550 = vpop.permute.xlu0 %549
    %552 = vst.msk [vmem:[#allocation7 + $0x48] sm:$0xff] %vm228, %v535
    %553 = vst.msk [vmem:[#allocation7 + $0x58] sm:$0xff] %vm228, %v540
    %554 = vst.msk [vmem:[#allocation7 + $0x68] sm:$0xff] %vm228, %v545
    %555 = vst.msk [vmem:[#allocation7 + $0x78] sm:$0xff] %vm228, %v550
    %556 = vst.msk [vmem:[#allocation7 + $0x8] sm:$0xff] %vm273, %v262
    %557 = vst.msk [vmem:[#allocation7 + $0x18] sm:$0xff] %vm273, %v264
    %558 = vst.msk [vmem:[#allocation7 + $0x28] sm:$0xff] %vm273, %v266
    %559 = vst.msk [vmem:[#allocation7 + $0x38] sm:$0xff] %vm273, %v268
    %v560 = vld [vmem:[#allocation5] sm:$0xff]
    %v561 = vld [vmem:[#allocation5 + $0x8] sm:$0xff]
    %v562 = vld [vmem:[#allocation5 + $0x10] sm:$0xff]
    %v563 = vld [vmem:[#allocation5 + $0x18] sm:$0xff]
    %565 = vset.pattern.permute.xlu0 13
    %566 = vperm.xlu0 %565, %v560
    %v567 = vpop.permute.xlu0 %566
    %570 = vset.pattern.permute.xlu0 13
    %571 = vperm.xlu0 %570, %v561
    %v572 = vpop.permute.xlu0 %571
    %575 = vset.pattern.permute.xlu0 13
    %576 = vperm.xlu0 %575, %v562
    %v577 = vpop.permute.xlu0 %576
    %580 = vset.pattern.permute.xlu0 13
    %581 = vperm.xlu0 %580, %v563
    %v582 = vpop.permute.xlu0 %581
    %584 = vst.msk [vmem:[#allocation7 + $0x48] sm:$0xff] %vm273, %v567
    %585 = vst.msk [vmem:[#allocation7 + $0x58] sm:$0xff] %vm273, %v572
    %586 = vst.msk [vmem:[#allocation7 + $0x68] sm:$0xff] %vm273, %v577
    %587 = vst.msk [vmem:[#allocation7 + $0x78] sm:$0xff] %vm273, %v582
    %588 = vst.msk [vmem:[#allocation7 + $0x8] sm:$0xff] %vm318, %v307
    %589 = vst.msk [vmem:[#allocation7 + $0x18] sm:$0xff] %vm318, %v309
    %590 = vst.msk [vmem:[#allocation7 + $0x28] sm:$0xff] %vm318, %v311
    %591 = vst.msk [vmem:[#allocation7 + $0x38] sm:$0xff] %vm318, %v313
    %v592 = vld [vmem:[#allocation5] sm:$0xff]
    %v593 = vld [vmem:[#allocation5 + $0x8] sm:$0xff]
    %v594 = vld [vmem:[#allocation5 + $0x10] sm:$0xff]
    %v595 = vld [vmem:[#allocation5 + $0x18] sm:$0xff]
    %597 = vset.pattern.permute.xlu0 14
    %598 = vperm.xlu0 %597, %v592
    %v599 = vpop.permute.xlu0 %598
    %602 = vset.pattern.permute.xlu0 14
    %603 = vperm.xlu0 %602, %v593
    %v604 = vpop.permute.xlu0 %603
    %607 = vset.pattern.permute.xlu0 14
    %608 = vperm.xlu0 %607, %v594
    %v609 = vpop.permute.xlu0 %608
    %612 = vset.pattern.permute.xlu0 14
    %613 = vperm.xlu0 %612, %v595
    %v614 = vpop.permute.xlu0 %613
    %616 = vst.msk [vmem:[#allocation7 + $0x48] sm:$0xff] %vm318, %v599
    %617 = vst.msk [vmem:[#allocation7 + $0x58] sm:$0xff] %vm318, %v604
    %618 = vst.msk [vmem:[#allocation7 + $0x68] sm:$0xff] %vm318, %v609
    %619 = vst.msk [vmem:[#allocation7 + $0x78] sm:$0xff] %vm318, %v614
    %620 = vst.msk [vmem:[#allocation7 + $0x8] sm:$0xff] %vm363, %v352
    %621 = vst.msk [vmem:[#allocation7 + $0x18] sm:$0xff] %vm363, %v354
    %622 = vst.msk [vmem:[#allocation7 + $0x28] sm:$0xff] %vm363, %v356
    %623 = vst.msk [vmem:[#allocation7 + $0x38] sm:$0xff] %vm363, %v358
    %v624 = vld [vmem:[#allocation5] sm:$0xff]
    %v625 = vld [vmem:[#allocation5 + $0x8] sm:$0xff]
    %v626 = vld [vmem:[#allocation5 + $0x10] sm:$0xff]
    %v627 = vld [vmem:[#allocation5 + $0x18] sm:$0xff]
    %629 = vset.pattern.permute.xlu0 15
    %630 = vperm.xlu0 %629, %v624
    %v631 = vpop.permute.xlu0 %630
    %634 = vset.pattern.permute.xlu0 15
    %635 = vperm.xlu0 %634, %v625
    %v636 = vpop.permute.xlu0 %635
    %639 = vset.pattern.permute.xlu0 15
    %640 = vperm.xlu0 %639, %v626
    %v641 = vpop.permute.xlu0 %640
    %644 = vset.pattern.permute.xlu0 15
    %645 = vperm.xlu0 %644, %v627
    %v646 = vpop.permute.xlu0 %645
    %648 = vst.msk [vmem:[#allocation7 + $0x48] sm:$0xff] %vm363, %v631
    %649 = vst.msk [vmem:[#allocation7 + $0x58] sm:$0xff] %vm363, %v636
    %650 = vst.msk [vmem:[#allocation7 + $0x68] sm:$0xff] %vm363, %v641
    %651 = vst.msk [vmem:[#allocation7 + $0x78] sm:$0xff] %vm363, %v646
    // Predicated region
    $region18: #{tpu_custom_call.1} parent=1 // pred_check
      _
    $region19: #{tpu_custom_call.1} parent=1 // pred_check_branch
      %653 = sbr.rel (0) target = $region21
    $region20: #{tpu_custom_call.1} parent=1 // pred_region
      %s655 = ssub.s32 2048, 2048
      %656 = vsyncadd [#allocation4], %s655
      %s657 = sshll.u32 [#allocation7], 4
      %s658 = int_to_ptr.vmem [resolvable:$true] %s657
      %663 = dma.vmem_to_hbm [thread:$0]  %s658, 2048, %s2, [#allocation4], 256, 256, 16
    $region21: #{tpu_custom_call.1} parent=1 // pred_fallthru
      _
    // Predicated region
    $region22: #{tpu_custom_call.1} parent=1 // pred_check
      _
    $region23: #{tpu_custom_call.1} parent=1 // pred_check_branch
      %665 = sbr.rel (0) target = $region25
    $region24: #{tpu_custom_call.1} parent=1 // pred_region
      %666 = dma.done [#allocation4], 2048
    $region25: #{tpu_custom_call.1} parent=1 // pred_fallthru
      _
    %667 = vsyncpa [#allocation3], 1
    %668 = vsyncpa [#allocation6], 1
    %669 = vsyncpa [#allocation4], 1

</llo_original>
